<compile_context>
chip_gen: v5e
topology: v5e:2x2
jax: 0.10.0
libtpu: 0.0.40
codegen_flags: <defaults>
</compile_context>

<pallas_src>
import functools

import jax
import jax.numpy as jnp
from jax import lax
from jax.experimental import pallas as pl
from jax.experimental.pallas import tpu as pltpu


def _round_up(x, m):
    return (x + m - 1) // m * m


def _choose_row_tile(M, tm, bytes_per_row):
    """MXU/sublane-aligned row tile whose grid is balanced for 2 TensorCores.

    - tile is a multiple of 16 (bf16 sublane pack); large tiles are multiples
      of 256 (fits both 4x128^2 and 2x256^2 MXUs).
    - when M allows, the grid has an even number (>= 2) of near-equal steps
      so dimension_semantics=("parallel",) keeps both v7x TCs busy.
    - tile is clamped so the double-buffered in+out blocks fit a ~24 MiB
      VMEM budget (below the 32 MiB vmem_limit_bytes we request).
    """
    budget = 24 * 1024 * 1024
    vmem_cap = max(256, (budget // max(bytes_per_row, 1)) // 16 * 16)
    tm = max(256, min(_round_up(tm, 256), vmem_cap))
    if M <= 512:
        # Single (possibly partial / masked-boundary) block; splitting a tiny
        # problem only adds per-step overhead.
        return _round_up(M, 16)
    if M <= tm:
        # Two even-ish steps so both TensorCores get work.
        return _round_up(pl.cdiv(M, 2), 16)
    n = pl.cdiv(M, tm)
    if n % 2:
        n += 1  # prefer an even step count for 2-TC balance
    return _round_up(pl.cdiv(M, n), 16)


def _proj_kernel(x_ref, w_ref, b_ref, o_ref):
    # x_ref: (tm, K) bf16   w_ref: (K, E) bf16   b_ref: (1, E) f32
    y = jnp.dot(x_ref[...], w_ref[...], preferred_element_type=jnp.float32)
    y = y + b_ref[...]
    o_ref[...] = y.astype(o_ref.dtype)


def _proj_ln_kernel(x_ref, w_ref, b_ref, g_ref, bt_ref, o_ref, *, eps):
    # Matmul (f32 accumulation) + bias + two-pass LayerNorm over embed axis.
    y = jnp.dot(x_ref[...], w_ref[...], preferred_element_type=jnp.float32)
    y = y + b_ref[...]
    mean = jnp.mean(y, axis=-1, keepdims=True)
    yc = y - mean
    var = jnp.mean(yc * yc, axis=-1, keepdims=True)
    y = yc * lax.rsqrt(var + eps) * g_ref[...] + bt_ref[...]
    o_ref[...] = y.astype(o_ref.dtype)


def patch_embed_2d(x, conv_w, conv_b, *, patch_size=4,
                   ln_gamma=None, ln_beta=None, eps=1e-5,
                   tm=2048, compute_dtype=jnp.bfloat16,
                   out_dtype=jnp.bfloat16):
    """PatchEmbed2D forward.

    x: (B, C, H, W) NCHW.  conv_w: (E, C, p, p).  conv_b: (E,).
    Returns (B, H//p, W//p, E) in `out_dtype` (default bf16 — halves the
    dominant writeback stream; pass jnp.float32 if the consumer needs it).
    `tm`: requested row tile; rounded to >=256 and rebalanced so the grid has
    an even number of steps for megacore sharding.  Sweep 1024..4096 per chip.
    """
    B, C, H, W = x.shape
    E = conv_w.shape[0]
    p = patch_size
    assert H % p == 0 and W % p == 0, "H and W must be divisible by patch_size"
    Hp, Wp = H // p, W // p
    K = C * p * p
    M = B * Hp * Wp

    # im2col: NCHW -> (M, K); flatten order (c, ph, pw) matches the Conv2d
    # weight flattening.  bf16 halves the dominant HBM read stream; with
    # allow_input_fusion XLA may fuse this transpose/cast into the kernel's
    # input DMA so the (M, K) matrix never round-trips HBM.
    patches = x.reshape(B, C, Hp, p, Wp, p)
    patches = jnp.transpose(patches, (0, 2, 4, 1, 3, 5)).reshape(M, K)
    patches = patches.astype(compute_dtype)

    w2d = conv_w.reshape(E, K).T.astype(compute_dtype)       # (K, E)
    b2d = conv_b.reshape(1, E).astype(jnp.float32)

    use_norm = ln_gamma is not None
    if use_norm:
        assert ln_beta is not None

    in_bytes = jnp.dtype(compute_dtype).itemsize
    out_bytes = jnp.dtype(out_dtype).itemsize
    bytes_per_row = 2 * K * in_bytes + 2 * E * out_bytes      # double-buffered
    tm_eff = _choose_row_tile(M, tm, bytes_per_row)
    grid = (pl.cdiv(M, tm_eff),)   # masked boundary block handles M % tm_eff

    x_spec = pl.BlockSpec((tm_eff, K), lambda i: (i, 0))
    w_spec = pl.BlockSpec((K, E), lambda i: (0, 0))
    v_spec = pl.BlockSpec((1, E), lambda i: (0, 0))
    o_spec = pl.BlockSpec((tm_eff, E), lambda i: (i, 0))

    if use_norm:
        kernel = functools.partial(_proj_ln_kernel, eps=eps)
        inputs = (patches, w2d, b2d,
                  ln_gamma.reshape(1, E).astype(jnp.float32),
                  ln_beta.reshape(1, E).astype(jnp.float32))
        in_specs = [x_spec, w_spec, v_spec, v_spec, v_spec]
    else:
        kernel = _proj_kernel
        inputs = (patches, w2d, b2d)
        in_specs = [x_spec, w_spec, v_spec]

    out = pl.pallas_call(
        kernel,
        out_shape=jax.ShapeDtypeStruct((M, E), out_dtype),
        grid_spec=pltpu.PrefetchScalarGridSpec(
            num_scalar_prefetch=0,
            grid=grid,
            in_specs=in_specs,
            out_specs=o_spec,
        ),
        compiler_params=pltpu.CompilerParams(
            dimension_semantics=("parallel",),
            # 32 MiB: > v5e's 16 MiB scoped default, <= half of v7x's 64 MiB
            # physical per-TC VMEM (headroom for scratch / second core).
            vmem_limit_bytes=32 * 1024 * 1024,
            # Only the patch matrix benefits from producer fusion.
            allow_input_fusion=[True] + [False] * (len(inputs) - 1),
        ),
    )(*inputs)

    return out.reshape(B, Hp, Wp, E)


def _reference(x, conv_w, conv_b, patch_size, ln_gamma, ln_beta, eps=1e-5):
    # Plain-JAX reference of the PyTorch forward (Conv2d stride=kernel,
    # permute(0,2,3,1), optional LayerNorm), in full f32.
    y = lax.conv_general_dilated(
        x.astype(jnp.float32), conv_w.astype(jnp.float32),
        window_strides=(patch_size, patch_size), padding="VALID",
        dimension_numbers=("NCHW", "OIHW", "NCHW"),
        precision=lax.Precision.HIGHEST)
    y = y + conv_b.reshape(1, -1, 1, 1)
    y = jnp.transpose(y, (0, 2, 3, 1))
    if ln_gamma is not None:
        mean = jnp.mean(y, axis=-1, keepdims=True)
        var = jnp.mean(jnp.square(y - mean), axis=-1, keepdims=True)
        y = (y - mean) * lax.rsqrt(var + eps) * ln_gamma + ln_beta
    return y


if __name__ == "__main__":
    key = jax.random.PRNGKey(0)
    keys = jax.random.split(key, 9)

    # ---- Config 1: patch_size=4, in_chans=4, embed_dim=32, LayerNorm, ----
    # ----           default bf16 output.                                ----
    B, C, H, W = 2, 4, 16, 16
    p, E = 4, 32
    x = jax.random.normal(keys[0], (B, C, H, W), jnp.float32)
    conv_w = 0.1 * jax.random.normal(keys[1], (E, C, p, p), jnp.float32)
    conv_b = 0.05 * jax.random.normal(keys[2], (E,), jnp.float32)
    ln_g = jnp.ones((E,), jnp.float32)    # PyTorch LayerNorm default init
    ln_b = jnp.zeros((E,), jnp.float32)

    fwd = jax.jit(lambda x_, w_, b_, g_, bt_: patch_embed_2d(
        x_, w_, b_, patch_size=p, ln_gamma=g_, ln_beta=bt_))
    out = jax.block_until_ready(fwd(x, conv_w, conv_b, ln_g, ln_b))
    ref = _reference(x, conv_w, conv_b, p, ln_g, ln_b)
    assert out.shape == (B, H // p, W // p, E)
    assert out.dtype == jnp.bfloat16
    assert jnp.allclose(out.astype(jnp.float32), ref,
                        atol=8e-2, rtol=8e-2), "config1 mismatch"

    # ---- Config 1b: same, but explicit f32 output path. ----
    fwd_f32 = jax.jit(lambda x_, w_, b_, g_, bt_: patch_embed_2d(
        x_, w_, b_, patch_size=p, ln_gamma=g_, ln_beta=bt_,
        out_dtype=jnp.float32))
    out_f32 = jax.block_until_ready(fwd_f32(x, conv_w, conv_b, ln_g, ln_b))
    assert out_f32.dtype == jnp.float32
    assert jnp.allclose(out_f32, ref, atol=3e-2, rtol=3e-2), "config1b mismatch"

    # ---- Config 2: module defaults (in_chans=3, embed_dim=96), no norm, ----
    # ---- f32 output, M=36 smaller than the (rounded) tile: exercises    ----
    # ---- the single masked boundary block.                              ----
    B2, C2, H2, W2, E2 = 1, 3, 24, 24, 96
    x2 = jax.random.normal(keys[3], (B2, C2, H2, W2), jnp.float32)
    conv_w2 = 0.1 * jax.random.normal(keys[4], (E2, C2, p, p), jnp.float32)
    conv_b2 = 0.05 * jax.random.normal(keys[5], (E2,), jnp.float32)

    fwd2 = jax.jit(lambda x_, w_, b_: patch_embed_2d(
        x_, w_, b_, patch_size=p, out_dtype=jnp.float32))
    out2 = jax.block_until_ready(fwd2(x2, conv_w2, conv_b2))
    ref2 = _reference(x2, conv_w2, conv_b2, p, None, None)
    assert out2.shape == (B2, H2 // p, W2 // p, E2)
    assert jnp.allclose(out2, ref2, atol=3e-2, rtol=3e-2), "config2 mismatch"

    # ---- Config 3: embed_dim=96 + LayerNorm, M=676 (> 512): exercises ----
    # ---- the even 2-step grid with a masked last block, bf16 output.   ----
    B3, C3, H3, W3, E3 = 1, 3, 104, 104, 96
    x3 = jax.random.normal(keys[6], (B3, C3, H3, W3), jnp.float32)
    conv_w3 = 0.1 * jax.random.normal(keys[7], (E3, C3, p, p), jnp.float32)
    conv_b3 = 0.05 * jax.random.normal(keys[8], (E3,), jnp.float32)
    ln_g3 = jnp.ones((E3,), jnp.float32)
    ln_b3 = jnp.zeros((E3,), jnp.float32)

    fwd3 = jax.jit(lambda x_, w_, b_, g_, bt_: patch_embed_2d(
        x_, w_, b_, patch_size=p, ln_gamma=g_, ln_beta=bt_))
    out3 = jax.block_until_ready(fwd3(x3, conv_w3, conv_b3, ln_g3, ln_b3))
    ref3 = _reference(x3, conv_w3, conv_b3, p, ln_g3, ln_b3)
    assert out3.shape == (B3, H3 // p, W3 // p, E3)
    assert jnp.allclose(out3.astype(jnp.float32), ref3,
                        atol=8e-2, rtol=8e-2), "config3 mismatch"

    print("KERNEL_OK")
</pallas_src>

<mosaic_0001>
module attributes {stable_mosaic.version = 11 : i64} {
  func.func @_proj_ln_kernel(%arg0: i32, %arg1: memref<32x64xbf16, #tpu.memory_space<vmem>>, %arg2: memref<64x32xbf16, #tpu.memory_space<vmem>>, %arg3: memref<1x32xf32, #tpu.memory_space<vmem>>, %arg4: memref<1x32xf32, #tpu.memory_space<vmem>>, %arg5: memref<1x32xf32, #tpu.memory_space<vmem>>, %arg6: memref<32x32xbf16, #tpu.memory_space<vmem>>) attributes {dimension_semantics = [#tpu.dimension_semantics<parallel>], iteration_bounds = array<i64: 1>, scalar_prefetch = 0 : i64, scratch_operands = 0 : i64, tpu.core_type = #tpu.core_type<tc>, window_params = [{transform_indices = @transform_0, window_bounds = array<i64: 32, 64>}, {pipeline_mode = #tpu.pipeline_mode<synchronous>, transform_indices = @transform_1, window_bounds = array<i64: 64, 32>}, {pipeline_mode = #tpu.pipeline_mode<synchronous>, transform_indices = @transform_2, window_bounds = array<i64: 1, 32>}, {pipeline_mode = #tpu.pipeline_mode<synchronous>, transform_indices = @transform_3, window_bounds = array<i64: 1, 32>}, {pipeline_mode = #tpu.pipeline_mode<synchronous>, transform_indices = @transform_4, window_bounds = array<i64: 1, 32>}, {transform_indices = @transform_5, window_bounds = array<i64: 32, 32>}]} {
    %c0 = arith.constant 0 : index
    %c0_0 = arith.constant 0 : index
    %0 = vector.load %arg1[%c0, %c0_0] : memref<32x64xbf16, #tpu.memory_space<vmem>>, vector<32x64xbf16>
    %c0_1 = arith.constant 0 : index
    %c0_2 = arith.constant 0 : index
    %1 = vector.load %arg2[%c0_1, %c0_2] : memref<64x32xbf16, #tpu.memory_space<vmem>>, vector<64x32xbf16>
    %cst = arith.constant dense<0.000000e+00> : vector<32x32xf32>
    %2 = tpu.matmul %0, %1, %cst {dimension_numbers = #tpu.dot_dimension_numbers<[1], [0], [0], [1], [0, 0, 1, 1], [], []>} : vector<32x64xbf16>, vector<64x32xbf16>, vector<32x32xf32> -> vector<32x32xf32>
    %c0_3 = arith.constant 0 : index
    %c0_4 = arith.constant 0 : index
    %3 = vector.load %arg3[%c0_3, %c0_4] : memref<1x32xf32, #tpu.memory_space<vmem>>, vector<1x32xf32>
    %4 = vector.broadcast %3 : vector<1x32xf32> to vector<32x32xf32>
    %5 = arith.addf %2, %4 : vector<32x32xf32>
    %cst_5 = arith.constant dense<0.000000e+00> : vector<32xf32>
    %6 = vector.multi_reduction <add>, %5, %cst_5 [1] : vector<32x32xf32> to vector<32xf32>
    %7 = vector.shape_cast %6 : vector<32xf32> to vector<32x1xf32>
    %cst_6 = arith.constant 3.200000e+01 : f32
    %8 = vector.broadcast %cst_6 : f32 to vector<32x1xf32>
    %9 = arith.divf %7, %8 : vector<32x1xf32>
    %10 = vector.broadcast %9 : vector<32x1xf32> to vector<32x32xf32>
    %11 = arith.subf %5, %10 : vector<32x32xf32>
    %12 = arith.mulf %11, %11 : vector<32x32xf32>
    %cst_7 = arith.constant dense<0.000000e+00> : vector<32xf32>
    %13 = vector.multi_reduction <add>, %12, %cst_7 [1] : vector<32x32xf32> to vector<32xf32>
    %14 = vector.shape_cast %13 : vector<32xf32> to vector<32x1xf32>
    %cst_8 = arith.constant 3.200000e+01 : f32
    %15 = vector.broadcast %cst_8 : f32 to vector<32x1xf32>
    %16 = arith.divf %14, %15 : vector<32x1xf32>
    %cst_9 = arith.constant 9.99999974E-6 : f32
    %17 = vector.broadcast %cst_9 : f32 to vector<32x1xf32>
    %18 = arith.addf %16, %17 : vector<32x1xf32>
    %19 = math.rsqrt %18 : vector<32x1xf32>
    %20 = vector.broadcast %19 : vector<32x1xf32> to vector<32x32xf32>
    %21 = arith.mulf %11, %20 : vector<32x32xf32>
    %c0_10 = arith.constant 0 : index
    %c0_11 = arith.constant 0 : index
    %22 = vector.load %arg4[%c0_10, %c0_11] : memref<1x32xf32, #tpu.memory_space<vmem>>, vector<1x32xf32>
    %23 = vector.broadcast %22 : vector<1x32xf32> to vector<32x32xf32>
    %24 = arith.mulf %21, %23 : vector<32x32xf32>
    %c0_12 = arith.constant 0 : index
    %c0_13 = arith.constant 0 : index
    %25 = vector.load %arg5[%c0_12, %c0_13] : memref<1x32xf32, #tpu.memory_space<vmem>>, vector<1x32xf32>
    %26 = vector.broadcast %25 : vector<1x32xf32> to vector<32x32xf32>
    %27 = arith.addf %24, %26 : vector<32x32xf32>
    %28 = arith.truncf %27 : vector<32x32xf32> to vector<32x32xbf16>
    %c0_14 = arith.constant 0 : index
    %c0_15 = arith.constant 0 : index
    %29 = vector.load %arg6[%c0_14, %c0_15] : memref<32x32xbf16, #tpu.memory_space<vmem>>, vector<32x32xbf16>
    tpu.vector_store %arg6[%c0_14, %c0_15], %28 {strides = array<i32>} : memref<32x32xbf16, #tpu.memory_space<vmem>>, vector<32x32xbf16>,
    return
  }
  func.func @transform_0(%arg0: i32) -> (i32, i32) {
    %c0_i32 = arith.constant 0 : i32
    %c0_i32_0 = arith.constant 0 : i32
    return %arg0, %c0_i32 : i32, i32
  }
  func.func @transform_1(%arg0: i32) -> (i32, i32) {
    %c0_i32 = arith.constant 0 : i32
    %c0_i32_0 = arith.constant 0 : i32
    %c0_i32_1 = arith.constant 0 : i32
    return %c0_i32, %c0_i32_0 : i32, i32
  }
  func.func @transform_2(%arg0: i32) -> (i32, i32) {
    %c0_i32 = arith.constant 0 : i32
    %c0_i32_0 = arith.constant 0 : i32
    %c0_i32_1 = arith.constant 0 : i32
    return %c0_i32, %c0_i32_0 : i32, i32
  }
  func.func @transform_3(%arg0: i32) -> (i32, i32) {
    %c0_i32 = arith.constant 0 : i32
    %c0_i32_0 = arith.constant 0 : i32
    %c0_i32_1 = arith.constant 0 : i32
    return %c0_i32, %c0_i32_0 : i32, i32
  }
  func.func @transform_4(%arg0: i32) -> (i32, i32) {
    %c0_i32 = arith.constant 0 : i32
    %c0_i32_0 = arith.constant 0 : i32
    %c0_i32_1 = arith.constant 0 : i32
    return %c0_i32, %c0_i32_0 : i32, i32
  }
  func.func @transform_5(%arg0: i32) -> (i32, i32) {
    %c0_i32 = arith.constant 0 : i32
    %c0_i32_0 = arith.constant 0 : i32
    return %arg0, %c0_i32 : i32, i32
  }
}

</mosaic_0001>

<llo_original>
// kernel: _lambda_.1
$region0: #{_lambda_.1}
  #allocation0 [shape = 'u32[]', space=smem, size = 0x4, offset = 0x4, fixed_abs, tag = 'smem constant byte address 0x4 - core index']
  #allocation1 [shape = 'u32[72,128]{1,0:T(1,128)}', space=vmem, size = 0x9000, scoped, tag = 'internal scratch']
  %s0 = inlined_call_operand.vmem [shape: bf16[32,64], index: 0, kind: input, shape index: {}]
  %s1 = inlined_call_operand.vmem [shape: bf16[64,32], index: 1, kind: input, shape index: {}]
  %s2 = inlined_call_operand.vmem [shape: f32[1,32], index: 2, kind: input, shape index: {}]
  %s3 = inlined_call_operand.vmem [shape: f32[1,32], index: 3, kind: input, shape index: {}]
  %s4 = inlined_call_operand.vmem [shape: f32[1,32], index: 4, kind: input, shape index: {}]
  %s5 = inlined_call_operand.hbm [shape: bf16[32,32], index: 5, kind: output, shape index: {}]
  %s6 = sld [smem:[#allocation0]]
  $region30: #{_lambda_.1} parent=0
    _
  %s8 = ssub.s32 1, %s6
  %s9 = scalar_select 0, %s8, %s6
  $region1: #{_lambda_.1} parent=0
    #allocation2 [shape = 'u8[8192]{0}', space=vmem, size = 0x2000, scoped, tag = 'output window, operand 0, single buffered']
    #allocation3 [shape = 's32[1]{0}', space=sflag, size = 0x4, scoped, tag = 'scoped memory for _lambda_.1']
    %10 = vsyncpa [#allocation3], 0
    // Predicated region
    $region2: #{_lambda_.1} parent=1 // pred_check
      _
    $region3: #{_lambda_.1} parent=1 // pred_check_branch
      %12 = sbr.rel (0) target = $region5
    $region4: #{_lambda_.1} parent=1 // pred_region
      _
    $region5: #{_lambda_.1} parent=1 // pred_fallthru
      _
    // Predicated region
    $region6: #{_lambda_.1} parent=1 // pred_check
      _
    $region7: #{_lambda_.1} parent=1 // pred_check_branch
      %14 = sbr.rel (0) target = $region9
    $region8: #{_lambda_.1} parent=1 // pred_region
      _
    $region9: #{_lambda_.1} parent=1 // pred_fallthru
      _
    // Predicated region
    $region10: #{_lambda_.1} parent=1 // pred_check
      _
    $region11: #{_lambda_.1} parent=1 // pred_check_branch
      %16 = sbr.rel (0) target = $region13
    $region12: #{_lambda_.1} parent=1 // pred_region
      _
    $region13: #{_lambda_.1} parent=1 // pred_fallthru
      _
    // Predicated region
    $region14: #{_lambda_.1} parent=1 // pred_check
      _
    $region15: #{_lambda_.1} parent=1 // pred_check_branch
      %18 = sbr.rel (0) target = $region17
    $region16: #{_lambda_.1} parent=1 // pred_region
      _
    $region17: #{_lambda_.1} parent=1 // pred_fallthru
      _
    // Predicated region
    $region18: #{_lambda_.1} parent=1 // pred_check
      _
    $region19: #{_lambda_.1} parent=1 // pred_check_branch
      %20 = sbr.rel (0) target = $region21
    $region20: #{_lambda_.1} parent=1 // pred_region
      _
    $region21: #{_lambda_.1} parent=1 // pred_fallthru
      _
    %v22 = vld [vmem:[%s0] sm:$0xf]
    %v23 = vld [vmem:[%s0 + $0x4] sm:$0xf]
    %v24 = vld [vmem:[%s0 + $0x8] sm:$0xf]
    %v25 = vld [vmem:[%s0 + $0xc] sm:$0xf]
    %v26 = vld [vmem:[%s1] sm:$0xf]
    %v27 = vld [vmem:[%s1 + $0x4] sm:$0xf]
    %v28 = vld [vmem:[%s1 + $0x8] sm:$0xf]
    %v29 = vld [vmem:[%s1 + $0xc] sm:$0xf]
    %v30 = vld [vmem:[%s1 + $0x10] sm:$0xf]
    %v31 = vld [vmem:[%s1 + $0x14] sm:$0xf]
    %v32 = vld [vmem:[%s1 + $0x18] sm:$0xf]
    %v33 = vld [vmem:[%s1 + $0x1c] sm:$0xf]
    %v34 = vld [vmem:[%s2] sm:$0x1]
    %v36 = vperm.slane %v34, 0
    %v42 = vunpack.c.l.b16 %v22
    %v43 = vunpack.c.l.b16 %v23
    %v44 = vunpack.c.l.b16 %v24
    %v45 = vunpack.c.l.b16 %v25
    %v46 = vpack.c.b16 %v43, %v42
    %v47 = vpack.c.b16 %v45, %v44
    %v56 = vunpack.c.l.b16 %v26
    %v57 = vunpack.c.l.b16 %v27
    %v58 = vunpack.c.l.b16 %v28
    %v59 = vunpack.c.l.b16 %v29
    %v60 = vunpack.c.l.b16 %v30
    %v61 = vunpack.c.l.b16 %v31
    %v62 = vunpack.c.l.b16 %v32
    %v63 = vunpack.c.l.b16 %v33
    %v64 = vpack.c.b16 %v57, %v56
    %v65 = vpack.c.b16 %v59, %v58
    %v66 = vpack.c.b16 %v61, %v60
    %v67 = vpack.c.b16 %v63, %v62
    %vm72 = vcmask 523264
    %v74 = vsel %vm72, %v46, 0
    %v77 = vsel %vm72, %v47, 0
    %79 = vmatpush.bf16.msra.mxu0 0
    %80 = vmatpush.bf16.msra.mxu0 0
    %81 = vmatpush.bf16.msra.mxu0 0
    %82 = vmatpush.bf16.msra.mxu0 0
    %83 = vmatpush.bf16.msra.mxu0 %v67
    %84 = vmatpush.bf16.msra.mxu0 %v66
    %85 = vmatpush.bf16.msra.mxu0 %v65
    %86 = vmatpush.bf16.msra.mxu0 %v64
    %87 = vmatmul.bf16.gmra.mxu0 %v74
    %v88 = vpop.f32.mrf.mxu0
    %v89 = vadd.f32 %v36, %v88
    %v90 = vpop.f32.mrf.mxu0
    %v91 = vadd.f32 %v36, %v90
    %92 = vmatmul.bf16.gmra.mxu0 %v77
    %v93 = vpop.f32.mrf.mxu0
    %v94 = vadd.f32 %v36, %v93
    %v95 = vpop.f32.mrf.mxu0
    %v96 = vadd.f32 %v36, %v95
    %97 = vdwg.mxu0
    %vm98 = vcmask 261120
    %v99 = vsel %vm98, %v89, 0.0
    %100 = vadd.xlane.f32.xlu0 %v99
    %v101 = vpop.xlane.xlu0 %100
    %v102 = vsel %vm98, %v91, 0.0
    %103 = vadd.xlane.f32.xlu0 %v102
    %v104 = vpop.xlane.xlu0 %103
    %v105 = vsel %vm98, %v94, 0.0
    %106 = vadd.xlane.f32.xlu0 %v105
    %v107 = vpop.xlane.xlu0 %106
    %v108 = vsel %vm98, %v96, 0.0
    %109 = vadd.xlane.f32.xlu0 %v108
    %v110 = vpop.xlane.xlu0 %109
    %v111 = vrcp.pop 32.0
    %v112 = vmul.f32 32.0, %v111
    %v113 = vsub.f32 1.0, %v112
    %v114 = vmul.f32 %v111, %v113
    %v115 = vadd.f32 %v111, %v114
    %vm116 = vweird.f32 %v111
    %v117 = vsel %vm116, %v111, %v115
    %v118 = vmul.f32 %v101, %v117
    %v119 = vmul.f32 %v104, %v117
    %v120 = vmul.f32 %v107, %v117
    %v121 = vmul.f32 %v110, %v117
    %v122 = vsub.f32 %v89, %v118
    %v123 = vsub.f32 %v91, %v119
    %v124 = vsub.f32 %v94, %v120
    %v125 = vsub.f32 %v96, %v121
    %v126 = vmul.f32 %v122, %v122
    %v127 = vmul.f32 %v123, %v123
    %v128 = vmul.f32 %v124, %v124
    %v129 = vmul.f32 %v125, %v125
    %v130 = vsel %vm98, %v126, 0.0
    %131 = vadd.xlane.f32.xlu0 %v130
    %v132 = vpop.xlane.xlu0 %131
    %v133 = vsel %vm98, %v127, 0.0
    %134 = vadd.xlane.f32.xlu0 %v133
    %v135 = vpop.xlane.xlu0 %134
    %v136 = vsel %vm98, %v128, 0.0
    %137 = vadd.xlane.f32.xlu0 %v136
    %v138 = vpop.xlane.xlu0 %137
    %v139 = vsel %vm98, %v129, 0.0
    %140 = vadd.xlane.f32.xlu0 %v139
    %v141 = vpop.xlane.xlu0 %140
    %v142 = vmul.f32 %v132, %v117
    %v143 = vmul.f32 %v135, %v117
    %v144 = vmul.f32 %v138, %v117
    %v145 = vmul.f32 %v141, %v117
    %v146 = vadd.f32 %v142, 1e-05
    %v147 = vadd.f32 %v143, 1e-05
    %v148 = vadd.f32 %v144, 1e-05
    %v149 = vadd.f32 %v145, 1e-05
    %v150 = vrsqrt.pop %v146
    %v151 = vmul.f32 %v150, %v146
    %v152 = vmul.f32 %v151, %v150
    %v153 = vmul.f32 0.5, %v152
    %v154 = vsub.f32 1.5, %v153
    %v155 = vmul.f32 %v150, %v154
    %vm156 = vweird.f32 %v146
    %vm157 = vweird.f32 %v150
    %vm158 = vmor %vm156, %vm157
    %v159 = vsel %vm158, %v150, %v155
    %v160 = vrsqrt.pop %v147
    %v161 = vmul.f32 %v160, %v147
    %v162 = vmul.f32 %v161, %v160
    %v163 = vmul.f32 0.5, %v162
    %v164 = vsub.f32 1.5, %v163
    %v165 = vmul.f32 %v160, %v164
    %vm166 = vweird.f32 %v147
    %vm167 = vweird.f32 %v160
    %vm168 = vmor %vm166, %vm167
    %v169 = vsel %vm168, %v160, %v165
    %v170 = vrsqrt.pop %v148
    %v171 = vmul.f32 %v170, %v148
    %v172 = vmul.f32 %v171, %v170
    %v173 = vmul.f32 0.5, %v172
    %v174 = vsub.f32 1.5, %v173
    %v175 = vmul.f32 %v170, %v174
    %vm176 = vweird.f32 %v148
    %vm177 = vweird.f32 %v170
    %vm178 = vmor %vm176, %vm177
    %v179 = vsel %vm178, %v170, %v175
    %v180 = vrsqrt.pop %v149
    %v181 = vmul.f32 %v180, %v149
    %v182 = vmul.f32 %v181, %v180
    %v183 = vmul.f32 0.5, %v182
    %v184 = vsub.f32 1.5, %v183
    %v185 = vmul.f32 %v180, %v184
    %vm186 = vweird.f32 %v149
    %vm187 = vweird.f32 %v180
    %vm188 = vmor %vm186, %vm187
    %v189 = vsel %vm188, %v180, %v185
    %v190 = vmul.f32 %v122, %v159
    %v191 = vmul.f32 %v123, %v169
    %v192 = vmul.f32 %v124, %v179
    %v193 = vmul.f32 %v125, %v189
    %v194 = vld [vmem:[%s3] sm:$0x1]
    %v196 = vperm.slane %v194, 0
    %v198 = vmul.f32 %v190, %v196
    %v199 = vmul.f32 %v191, %v196
    %v200 = vmul.f32 %v192, %v196
    %v201 = vmul.f32 %v193, %v196
    %v202 = vld [vmem:[%s4] sm:$0x1]
    %v204 = vperm.slane %v202, 0
    %v206 = vadd.f32 %v198, %v204
    %v207 = vadd.f32 %v199, %v204
    %v208 = vadd.f32 %v200, %v204
    %v209 = vadd.f32 %v201, %v204
    %v210 = vpack.c.bf16 %v206, %v206
    %v211 = vpack.c.bf16 %v207, %v207
    %v212 = vpack.c.bf16 %v208, %v208
    %v213 = vpack.c.bf16 %v209, %v209
    %vm214 = vcmask 257024
    %215 = vst.msk [vmem:[#allocation2] sm:$0xf] %vm214, %v210
    %216 = vst.msk [vmem:[#allocation2 + $0x4] sm:$0xf] %vm214, %v211
    %217 = vst.msk [vmem:[#allocation2 + $0x8] sm:$0xf] %vm214, %v212
    %218 = vst.msk [vmem:[#allocation2 + $0xc] sm:$0xf] %vm214, %v213
    // Predicated region
    $region22: #{_lambda_.1} parent=1 // pred_check
      _
    $region23: #{_lambda_.1} parent=1 // pred_check_branch
      %220 = sbr.rel (0) target = $region25
    $region24: #{_lambda_.1} parent=1 // pred_region
      %222 = vsyncadd [#allocation3], 0
      %s223 = sshll.u32 [#allocation2], 4
      %s224 = int_to_ptr.vmem [resolvable:$true] %s223
      %s225 = sshll.u32 %s5, 4
      %s226 = int_to_ptr.hbm [resolvable:$true] %s225
      %231 = dma.vmem_to_hbm [thread:$0]  %s224, 256, %s226, [#allocation3], 64, 64, 4
    $region25: #{_lambda_.1} parent=1 // pred_fallthru
      _
    // Predicated region
    $region26: #{_lambda_.1} parent=1 // pred_check
      _
    $region27: #{_lambda_.1} parent=1 // pred_check_branch
      %233 = sbr.rel (0) target = $region29
    $region28: #{_lambda_.1} parent=1 // pred_region
      %235 = dma.done [#allocation3], 256
    $region29: #{_lambda_.1} parent=1 // pred_fallthru
      _
    %236 = vsyncpa [#allocation3], 1

</llo_original>
